<compile_context>
chip_gen: v6e
topology: v6e:2x2x1
jax: 0.10.0
libtpu: 0.0.40
codegen_flags: <defaults>
</compile_context>

<pallas_src>
import functools

import jax
import jax.numpy as jnp
from jax.experimental import pallas as pl
from jax.experimental.pallas import tpu as pltpu


LANE = 128          # TPU lane width
SUBLANE = 8         # TPU sublane width
MAX_TILE_N = 512    # rows per grid step; small enough for v7x's 64 MiB VMEM,
                    # big enough to hit ~85% of HBM roofline on all gens.


def _round_up(a, b):
    return (a + b - 1) // b * b


# ----------------------------- Pallas kernel -------------------------------
def _make_fused_mlp_kernel(parts_per_layer, activation, compute_dtype,
                           last_true_width, input_true_width,
                           final_concat, out_pad_final):
    """Builds the fused-MLP kernel body.

    parts_per_layer: tuple (per layer) of tuples of sources, each source is
      "prev"  -> the running activation (initially the input tile)
      "input" -> the original (padded) input tile (skip connection)
    The kernel consumes refs in order:
      x_ref, [W_l0_p0, (W_l0_p1,) b_l0, W_l1_p0, ...], o_ref
    """

    def kernel(*refs):
        x_ref = refs[0]
        o_ref = refs[-1]
        wb_refs = refs[1:-1]

        x = x_ref[...]                         # [TILE_N, in_pad], compute dtype
        prev = x                               # running activation (compute dtype)
        y_f32 = None
        idx = 0
        for parts in parts_per_layer:
            acc = None
            for src in parts:
                operand = prev if src == "prev" else x
                w = wb_refs[idx][...]          # [src_pad, out_pad], compute dtype
                idx += 1
                d = jnp.dot(operand, w, preferred_element_type=jnp.float32)
                acc = d if acc is None else acc + d
            b = wb_refs[idx][...]              # [1, out_pad], f32
            idx += 1
            y_f32 = acc + b                    # bias + activation in f32 (VPU/EUP)
            if activation == "relu":
                y_f32 = jnp.maximum(y_f32, 0.0)
            elif activation == "softplus":
                y_f32 = jnp.logaddexp(y_f32, 0.0)   # stable softplus
            elif activation == "sigmoid":
                y_f32 = jax.nn.sigmoid(y_f32)
            prev = y_f32.astype(compute_dtype)      # operand for the next dot

        if final_concat:
            # PyTorch: last layer index is in skip_at -> return cat((y, x), -1)
            xf = x[:, :input_true_width].astype(jnp.float32)
            yc = jnp.concatenate([y_f32[:, :last_true_width], xf], axis=-1)
            pad = out_pad_final - yc.shape[-1]
            if pad > 0:
                yc = jnp.pad(yc, ((0, 0), (0, pad)))
            o_ref[...] = yc.astype(o_ref.dtype)
        else:
            o_ref[...] = y_f32.astype(o_ref.dtype)

    return kernel


# --------------------------- MLP module (JAX glue) --------------------------
class MLP:
    def __init__(self, input_dim, widths, act=None, skip_at=None, *, key,
                 compute_dtype=jnp.float32):
        depth = len(widths)
        self.input_dim = input_dim
        self.widths = list(widths)
        self.compute_dtype = compute_dtype
        if act is None:
            act = [None] * depth
        assert len(act) == depth

        # Reproduce PyTorch module logic: the last string activation seen
        # becomes self.activ and is applied to every layer (incl. the final one).
        self.activ = None
        for a in act:
            if isinstance(a, str):
                if a in ("relu", "softplus", "sigmoid"):
                    self.activ = a
                else:
                    raise NotImplementedError(a)

        self.skip_at = skip_at

        # ---- raw (unpadded) parameters, PyTorch-identical layout/init ------
        # W stored as [in, out] so forward is x @ W + b  (== x @ W_pt.T + b).
        self.params = []   # list of (W_full [in_total, out], b [out]) in f32
        prev_w = input_dim
        keys = jax.random.split(key, depth)
        for i, w in enumerate(widths):
            bound = 1.0 / (prev_w ** 0.5)   # nn.Linear default init
            kw, kb = jax.random.split(keys[i])
            W = jax.random.uniform(kw, (prev_w, w), jnp.float32, -bound, bound)
            B = jax.random.uniform(kb, (w,), jnp.float32, -bound, bound)
            self.params.append((W, B))
            prev_w = w
            if skip_at and i in skip_at:
                prev_w += input_dim

        # ---- padded / split parameters for the fused kernel ---------------
        self.in_pad = _round_up(input_dim, LANE)
        self._packed = []         # per layer: (part_defs, [padded W parts], padded b)
        parts_per_layer = []
        for i, (W_full, B) in enumerate(self.params):
            out_true = widths[i]
            out_pad = _round_up(out_true, LANE)
            if i == 0:
                part_defs = [("prev", input_dim)]
            else:
                part_defs = [("prev", widths[i - 1])]
                if skip_at and (i - 1) in skip_at:
                    part_defs.append(("input", input_dim))
            # split W_full rows per part (order matches torch.cat((y, x))),
            # then zero-pad each part to (round_up(src, 128), out_pad).
            w_parts = []
            row0 = 0
            for (_, src_true) in part_defs:
                rows_pad = _round_up(src_true, LANE)
                Wp = jnp.zeros((rows_pad, out_pad), jnp.float32)
                Wp = Wp.at[:src_true, :out_true].set(W_full[row0:row0 + src_true, :])
                w_parts.append(Wp.astype(compute_dtype))
                row0 += src_true
            Bp = jnp.zeros((1, out_pad), jnp.float32).at[0, :out_true].set(B)
            self._packed.append((part_defs, w_parts, Bp))
            parts_per_layer.append(tuple(s for s, _ in part_defs))

        # ---- output geometry ----------------------------------------------
        last_true = widths[-1]
        self._final_concat = bool(skip_at) and (depth - 1) in skip_at
        self.out_true = last_true + (input_dim if self._final_concat else 0)
        self.out_pad = _round_up(self.out_true, LANE)

        self._kernel = _make_fused_mlp_kernel(
            tuple(parts_per_layer), self.activ, compute_dtype,
            last_true, input_dim, self._final_concat, self.out_pad)

    # ------------------------------------------------------------------ call
    def __call__(self, x):
        n = x.shape[0]
        tile_n = min(MAX_TILE_N, _round_up(max(n, 1), SUBLANE))
        n_pad = _round_up(n, tile_n)
        grid = (n_pad // tile_n,)

        # One-time pad of the input (zeros in padded rows/lanes are harmless:
        # the corresponding weight rows are zero and padded outputs are sliced
        # off below).
        x_pad = jnp.zeros((n_pad, self.in_pad), self.compute_dtype)
        x_pad = x_pad.at[:n, :self.input_dim].set(x.astype(self.compute_dtype))

        flat_wb = []
        in_specs = [pl.BlockSpec((tile_n, self.in_pad), lambda i: (i, 0))]
        for (_, w_parts, b) in self._packed:
            for w in w_parts:
                flat_wb.append(w)
                in_specs.append(pl.BlockSpec(w.shape, lambda i: (0, 0)))
            flat_wb.append(b)
            in_specs.append(pl.BlockSpec(b.shape, lambda i: (0, 0)))

        out = pl.pallas_call(
            self._kernel,
            grid=grid,
            in_specs=in_specs,
            out_specs=pl.BlockSpec((tile_n, self.out_pad), lambda i: (i, 0)),
            out_shape=jax.ShapeDtypeStruct((n_pad, self.out_pad), jnp.float32),
            compiler_params=pltpu.CompilerParams(
                dimension_semantics=("parallel",)),
            cost_estimate=self._cost_estimate(n_pad),
        )(x_pad, *flat_wb)

        return out[:n, :self.out_true]

    # ------------------------------------------------------------ cost hint
    def _cost_estimate(self, n_pad):
        flops = 0
        transcendentals = 0
        bytes_accessed = n_pad * self.in_pad * jnp.dtype(self.compute_dtype).itemsize
        for (_, w_parts, b) in self._packed:
            out_pad = w_parts[0].shape[1]
            for w in w_parts:
                flops += 2 * n_pad * w.shape[0] * w.shape[1]
                bytes_accessed += w.size * w.dtype.itemsize
            bytes_accessed += b.size * b.dtype.itemsize
            if self.activ in ("softplus", "sigmoid"):
                transcendentals += n_pad * out_pad
        bytes_accessed += n_pad * self.out_pad * 4
        return pl.CostEstimate(flops=flops,
                               transcendentals=transcendentals,
                               bytes_accessed=bytes_accessed)


# --------------------------------- demo -------------------------------------
if __name__ == "__main__":
    key = jax.random.PRNGKey(0)
    k_in, k_mlp = jax.random.split(key)

    N = 8            # batch of points
    input_dim = 16
    widths = [32, 32, 16]
    act = ["relu", "relu", "relu"]
    skip_at = [1]    # concat input after layer 1 -> layer 2 input = 32 + 16

    x = jax.random.normal(k_in, (N, input_dim), jnp.float32)

    # f32 path: must match the PyTorch/pure-JAX reference tightly.
    mlp_f32 = MLP(input_dim, widths, act=act, skip_at=skip_at, key=k_mlp,
                  compute_dtype=jnp.float32)
    out_f32 = jax.block_until_ready(mlp_f32(x))

    # Pure-JAX reference (PyTorch semantics, same unpadded params).
    def ref_forward(x):
        x_ = x + 0
        y = x_
        for i, (W, B) in enumerate(mlp_f32.params):
            y = x_ @ W + B
            y = jnp.maximum(y, 0.0)
            if skip_at and i in skip_at:
                y = jnp.concatenate((y, x), axis=-1)
            x_ = y
        return y

    ref = ref_forward(x)
    assert out_f32.shape == (N, widths[-1]), out_f32.shape
    assert jnp.allclose(out_f32, ref, atol=1e-5, rtol=1e-5), "f32 mismatch vs reference"

    # bf16-matmul path (recommended for v6e/v7x): same params, f32 accumulation,
    # compared with a loose tolerance against the f32 reference.
    mlp_bf16 = MLP(input_dim, widths, act=act, skip_at=skip_at, key=k_mlp,
                   compute_dtype=jnp.bfloat16)
    out_bf16 = jax.block_until_ready(mlp_bf16(x))
    assert out_bf16.shape == (N, widths[-1]), out_bf16.shape
    assert jnp.allclose(out_bf16, ref, atol=1e-1, rtol=1e-1), "bf16 mismatch vs reference"

    print("KERNEL_OK")
</pallas_src>

<mosaic_0001>
module attributes {stable_mosaic.version = 11 : i64} {
  func.func @kernel(%arg0: i32, %arg1: memref<8x128xf32, #tpu.memory_space<vmem>>, %arg2: memref<128x128xf32, #tpu.memory_space<vmem>>, %arg3: memref<1x128xf32, #tpu.memory_space<vmem>>, %arg4: memref<128x128xf32, #tpu.memory_space<vmem>>, %arg5: memref<1x128xf32, #tpu.memory_space<vmem>>, %arg6: memref<128x128xf32, #tpu.memory_space<vmem>>, %arg7: memref<128x128xf32, #tpu.memory_space<vmem>>, %arg8: memref<1x128xf32, #tpu.memory_space<vmem>>, %arg9: memref<8x128xf32, #tpu.memory_space<vmem>>) attributes {dimension_semantics = [#tpu.dimension_semantics<parallel>], iteration_bounds = array<i64: 1>, scalar_prefetch = 0 : i64, scratch_operands = 0 : i64, tpu.core_type = #tpu.core_type<tc>, window_params = [{transform_indices = @transform_0, window_bounds = array<i64: 8, 128>}, {pipeline_mode = #tpu.pipeline_mode<synchronous>, transform_indices = @transform_1, window_bounds = array<i64: 128, 128>}, {pipeline_mode = #tpu.pipeline_mode<synchronous>, transform_indices = @transform_2, window_bounds = array<i64: 1, 128>}, {pipeline_mode = #tpu.pipeline_mode<synchronous>, transform_indices = @transform_3, window_bounds = array<i64: 128, 128>}, {pipeline_mode = #tpu.pipeline_mode<synchronous>, transform_indices = @transform_4, window_bounds = array<i64: 1, 128>}, {pipeline_mode = #tpu.pipeline_mode<synchronous>, transform_indices = @transform_5, window_bounds = array<i64: 128, 128>}, {pipeline_mode = #tpu.pipeline_mode<synchronous>, transform_indices = @transform_6, window_bounds = array<i64: 128, 128>}, {pipeline_mode = #tpu.pipeline_mode<synchronous>, transform_indices = @transform_7, window_bounds = array<i64: 1, 128>}, {transform_indices = @transform_8, window_bounds = array<i64: 8, 128>}]} {
    %c0 = arith.constant 0 : index
    %c0_0 = arith.constant 0 : index
    %0 = vector.load %arg1[%c0, %c0_0] : memref<8x128xf32, #tpu.memory_space<vmem>>, vector<8x128xf32>
    %c0_1 = arith.constant 0 : index
    %c0_2 = arith.constant 0 : index
    %1 = vector.load %arg2[%c0_1, %c0_2] : memref<128x128xf32, #tpu.memory_space<vmem>>, vector<128x128xf32>
    %cst = arith.constant dense<0.000000e+00> : vector<8x128xf32>
    %2 = tpu.matmul %0, %1, %cst {dimension_numbers = #tpu.dot_dimension_numbers<[1], [0], [0], [1], [0, 0, 1, 1], [], []>} : vector<8x128xf32>, vector<128x128xf32>, vector<8x128xf32> -> vector<8x128xf32>
    %c0_3 = arith.constant 0 : index
    %c0_4 = arith.constant 0 : index
    %3 = vector.load %arg3[%c0_3, %c0_4] : memref<1x128xf32, #tpu.memory_space<vmem>>, vector<1x128xf32>
    %4 = vector.broadcast %3 : vector<1x128xf32> to vector<8x128xf32>
    %5 = arith.addf %2, %4 : vector<8x128xf32>
    %cst_5 = arith.constant 0.000000e+00 : f32
    %6 = vector.broadcast %cst_5 : f32 to vector<8x128xf32>
    %7 = arith.maximumf %5, %6 : vector<8x128xf32>
    %c0_6 = arith.constant 0 : index
    %c0_7 = arith.constant 0 : index
    %8 = vector.load %arg4[%c0_6, %c0_7] : memref<128x128xf32, #tpu.memory_space<vmem>>, vector<128x128xf32>
    %cst_8 = arith.constant dense<0.000000e+00> : vector<8x128xf32>
    %9 = tpu.matmul %7, %8, %cst_8 {dimension_numbers = #tpu.dot_dimension_numbers<[1], [0], [0], [1], [0, 0, 1, 1], [], []>} : vector<8x128xf32>, vector<128x128xf32>, vector<8x128xf32> -> vector<8x128xf32>
    %c0_9 = arith.constant 0 : index
    %c0_10 = arith.constant 0 : index
    %10 = vector.load %arg5[%c0_9, %c0_10] : memref<1x128xf32, #tpu.memory_space<vmem>>, vector<1x128xf32>
    %11 = vector.broadcast %10 : vector<1x128xf32> to vector<8x128xf32>
    %12 = arith.addf %9, %11 : vector<8x128xf32>
    %cst_11 = arith.constant 0.000000e+00 : f32
    %13 = vector.broadcast %cst_11 : f32 to vector<8x128xf32>
    %14 = arith.maximumf %12, %13 : vector<8x128xf32>
    %c0_12 = arith.constant 0 : index
    %c0_13 = arith.constant 0 : index
    %15 = vector.load %arg6[%c0_12, %c0_13] : memref<128x128xf32, #tpu.memory_space<vmem>>, vector<128x128xf32>
    %cst_14 = arith.constant dense<0.000000e+00> : vector<8x128xf32>
    %16 = tpu.matmul %14, %15, %cst_14 {dimension_numbers = #tpu.dot_dimension_numbers<[1], [0], [0], [1], [0, 0, 1, 1], [], []>} : vector<8x128xf32>, vector<128x128xf32>, vector<8x128xf32> -> vector<8x128xf32>
    %c0_15 = arith.constant 0 : index
    %c0_16 = arith.constant 0 : index
    %17 = vector.load %arg7[%c0_15, %c0_16] : memref<128x128xf32, #tpu.memory_space<vmem>>, vector<128x128xf32>
    %cst_17 = arith.constant dense<0.000000e+00> : vector<8x128xf32>
    %18 = tpu.matmul %0, %17, %cst_17 {dimension_numbers = #tpu.dot_dimension_numbers<[1], [0], [0], [1], [0, 0, 1, 1], [], []>} : vector<8x128xf32>, vector<128x128xf32>, vector<8x128xf32> -> vector<8x128xf32>
    %19 = arith.addf %16, %18 : vector<8x128xf32>
    %c0_18 = arith.constant 0 : index
    %c0_19 = arith.constant 0 : index
    %20 = vector.load %arg8[%c0_18, %c0_19] : memref<1x128xf32, #tpu.memory_space<vmem>>, vector<1x128xf32>
    %21 = vector.broadcast %20 : vector<1x128xf32> to vector<8x128xf32>
    %22 = arith.addf %19, %21 : vector<8x128xf32>
    %cst_20 = arith.constant 0.000000e+00 : f32
    %23 = vector.broadcast %cst_20 : f32 to vector<8x128xf32>
    %24 = arith.maximumf %22, %23 : vector<8x128xf32>
    %c0_21 = arith.constant 0 : index
    %c0_22 = arith.constant 0 : index
    %25 = vector.load %arg9[%c0_21, %c0_22] : memref<8x128xf32, #tpu.memory_space<vmem>>, vector<8x128xf32>
    tpu.vector_store %arg9[%c0_21, %c0_22], %24 {strides = array<i32>} : memref<8x128xf32, #tpu.memory_space<vmem>>, vector<8x128xf32>,
    return
  }
  func.func @transform_0(%arg0: i32) -> (i32, i32) {
    %c0_i32 = arith.constant 0 : i32
    %c0_i32_0 = arith.constant 0 : i32
    return %arg0, %c0_i32 : i32, i32
  }
  func.func @transform_1(%arg0: i32) -> (i32, i32) {
    %c0_i32 = arith.constant 0 : i32
    %c0_i32_0 = arith.constant 0 : i32
    %c0_i32_1 = arith.constant 0 : i32
    return %c0_i32, %c0_i32_0 : i32, i32
  }
  func.func @transform_2(%arg0: i32) -> (i32, i32) {
    %c0_i32 = arith.constant 0 : i32
    %c0_i32_0 = arith.constant 0 : i32
    %c0_i32_1 = arith.constant 0 : i32
    return %c0_i32, %c0_i32_0 : i32, i32
  }
  func.func @transform_3(%arg0: i32) -> (i32, i32) {
    %c0_i32 = arith.constant 0 : i32
    %c0_i32_0 = arith.constant 0 : i32
    %c0_i32_1 = arith.constant 0 : i32
    return %c0_i32, %c0_i32_0 : i32, i32
  }
  func.func @transform_4(%arg0: i32) -> (i32, i32) {
    %c0_i32 = arith.constant 0 : i32
    %c0_i32_0 = arith.constant 0 : i32
    %c0_i32_1 = arith.constant 0 : i32
    return %c0_i32, %c0_i32_0 : i32, i32
  }
  func.func @transform_5(%arg0: i32) -> (i32, i32) {
    %c0_i32 = arith.constant 0 : i32
    %c0_i32_0 = arith.constant 0 : i32
    %c0_i32_1 = arith.constant 0 : i32
    return %c0_i32, %c0_i32_0 : i32, i32
  }
  func.func @transform_6(%arg0: i32) -> (i32, i32) {
    %c0_i32 = arith.constant 0 : i32
    %c0_i32_0 = arith.constant 0 : i32
    %c0_i32_1 = arith.constant 0 : i32
    return %c0_i32, %c0_i32_0 : i32, i32
  }
  func.func @transform_7(%arg0: i32) -> (i32, i32) {
    %c0_i32 = arith.constant 0 : i32
    %c0_i32_0 = arith.constant 0 : i32
    %c0_i32_1 = arith.constant 0 : i32
    return %c0_i32, %c0_i32_0 : i32, i32
  }
  func.func @transform_8(%arg0: i32) -> (i32, i32) {
    %c0_i32 = arith.constant 0 : i32
    %c0_i32_0 = arith.constant 0 : i32
    return %arg0, %c0_i32 : i32, i32
  }
}

</mosaic_0001>

<llo_original>
// kernel: tpu_custom_call.1
$region0: #{tpu_custom_call.1}
  #allocation0 [shape = 'u32[]', space=smem, size = 0x4, offset = 0x4, fixed_abs, tag = 'smem constant byte address 0x4 - core index']
  #allocation1 [shape = 'u32[144,128]{1,0:T(1,128)}', space=vmem, size = 0x12000, scoped, tag = 'internal scratch']
  %s0 = inlined_call_operand.hbm [shape: f32[8,128], index: 0, kind: input, shape index: {}]
  %s1 = inlined_call_operand.hbm [shape: f32[128,128], index: 1, kind: input, shape index: {}]
  %s2 = inlined_call_operand.vmem [shape: f32[1,128], index: 2, kind: input, shape index: {}]
  %s3 = inlined_call_operand.hbm [shape: f32[128,128], index: 3, kind: input, shape index: {}]
  %s4 = inlined_call_operand.vmem [shape: f32[1,128], index: 4, kind: input, shape index: {}]
  %s5 = inlined_call_operand.hbm [shape: f32[128,128], index: 5, kind: input, shape index: {}]
  %s6 = inlined_call_operand.hbm [shape: f32[128,128], index: 6, kind: input, shape index: {}]
  %s7 = inlined_call_operand.vmem [shape: f32[1,128], index: 7, kind: input, shape index: {}]
  %s8 = inlined_call_operand.hbm [shape: f32[8,128], index: 8, kind: output, shape index: {}]
  %s9 = sld [smem:[#allocation0]]
  $region62: #{tpu_custom_call.1} parent=0
    _
  %s11 = ssub.s32 1, %s9
  %s12 = scalar_select 0, %s11, %s9
  $region1: #{tpu_custom_call.1} parent=0
    #allocation2 [shape = 'u8[4096]{0}', space=vmem, size = 0x1000, scoped, tag = 'input window, operand 0, single buffered']
    #allocation3 [shape = 's32[1]{0}', space=sflag, size = 0x4, scoped, tag = 'scoped memory for tpu_custom_call.1']
    #allocation4 [shape = 's32[1]{0}', space=sflag, size = 0x4, scoped, tag = 'scoped memory for tpu_custom_call.1']
    #allocation5 [shape = 'u8[65536]{0}', space=vmem, size = 0x10000, scoped, tag = 'input window, operand 1, single buffered']
    #allocation6 [shape = 's32[1]{0}', space=sflag, size = 0x4, scoped, tag = 'scoped memory for tpu_custom_call.1']
    #allocation7 [shape = 'u8[65536]{0}', space=vmem, size = 0x10000, scoped, tag = 'input window, operand 3, single buffered']
    #allocation8 [shape = 'u8[65536]{0}', space=vmem, size = 0x10000, scoped, tag = 'input window, operand 5, single buffered']
    #allocation9 [shape = 's32[1]{0}', space=sflag, size = 0x4, scoped, tag = 'scoped memory for tpu_custom_call.1']
    #allocation10 [shape = 'u8[65536]{0}', space=vmem, size = 0x10000, scoped, tag = 'input window, operand 6, single buffered']
    #allocation11 [shape = 'u8[4096]{0}', space=vmem, size = 0x1000, scoped, tag = 'output window, operand 0, single buffered']
    %13 = vsyncpa [#allocation3], 0
    %14 = vsyncpa [#allocation6], 0
    %15 = vsyncpa [#allocation9], 0
    %16 = vsyncpa [#allocation4], 0
    // Predicated region
    $region2: #{tpu_custom_call.1} parent=1 // pred_check
      _
    $region3: #{tpu_custom_call.1} parent=1 // pred_check_branch
      %18 = sbr.rel (0) target = $region5
    $region4: #{tpu_custom_call.1} parent=1 // pred_region
      %s20 = ssub.s32 128, 128
      %21 = vsyncadd [#allocation3], %s20
      %s23 = sshll.u32 [#allocation2], 4
      %s24 = int_to_ptr.vmem [resolvable:$true] %s23
      %26 = dma.hbm_to_vmem [thread:$0]  %s0, 128, %s24, [#allocation3]
    $region5: #{tpu_custom_call.1} parent=1 // pred_fallthru
      _
    // Predicated region
    $region6: #{tpu_custom_call.1} parent=1 // pred_check
      _
    $region7: #{tpu_custom_call.1} parent=1 // pred_check_branch
      %28 = sbr.rel (0) target = $region9
    $region8: #{tpu_custom_call.1} parent=1 // pred_region
      %s30 = ssub.s32 2048, 2048
      %31 = vsyncadd [#allocation6], %s30
      %s32 = sshll.u32 [#allocation5], 4
      %s33 = int_to_ptr.vmem [resolvable:$true] %s32
      %38 = dma.hbm_to_vmem [thread:$0]  %s1, 2048, %s33, [#allocation6], 128, 128, 8
    $region9: #{tpu_custom_call.1} parent=1 // pred_fallthru
      _
    // Predicated region
    $region10: #{tpu_custom_call.1} parent=1 // pred_check
      _
    $region11: #{tpu_custom_call.1} parent=1 // pred_check_branch
      %40 = sbr.rel (0) target = $region13
    $region12: #{tpu_custom_call.1} parent=1 // pred_region
      _
    $region13: #{tpu_custom_call.1} parent=1 // pred_fallthru
      _
    // Predicated region
    $region14: #{tpu_custom_call.1} parent=1 // pred_check
      _
    $region15: #{tpu_custom_call.1} parent=1 // pred_check_branch
      %42 = sbr.rel (0) target = $region17
    $region16: #{tpu_custom_call.1} parent=1 // pred_region
      %s44 = ssub.s32 2048, 2048
      %45 = vsyncadd [#allocation6], %s44
      %s46 = sshll.u32 [#allocation7], 4
      %s47 = int_to_ptr.vmem [resolvable:$true] %s46
      %52 = dma.hbm_to_vmem [thread:$0]  %s3, 2048, %s47, [#allocation6], 128, 128, 8
    $region17: #{tpu_custom_call.1} parent=1 // pred_fallthru
      _
    // Predicated region
    $region18: #{tpu_custom_call.1} parent=1 // pred_check
      _
    $region19: #{tpu_custom_call.1} parent=1 // pred_check_branch
      %54 = sbr.rel (0) target = $region21
    $region20: #{tpu_custom_call.1} parent=1 // pred_region
      _
    $region21: #{tpu_custom_call.1} parent=1 // pred_fallthru
      _
    // Predicated region
    $region22: #{tpu_custom_call.1} parent=1 // pred_check
      _
    $region23: #{tpu_custom_call.1} parent=1 // pred_check_branch
      %56 = sbr.rel (0) target = $region25
    $region24: #{tpu_custom_call.1} parent=1 // pred_region
      %s58 = ssub.s32 2048, 2048
      %59 = vsyncadd [#allocation9], %s58
      %s60 = sshll.u32 [#allocation8], 4
      %s61 = int_to_ptr.vmem [resolvable:$true] %s60
      %66 = dma.hbm_to_vmem [thread:$0]  %s5, 2048, %s61, [#allocation9], 128, 128, 8
    $region25: #{tpu_custom_call.1} parent=1 // pred_fallthru
      _
    // Predicated region
    $region26: #{tpu_custom_call.1} parent=1 // pred_check
      _
    $region27: #{tpu_custom_call.1} parent=1 // pred_check_branch
      %68 = sbr.rel (0) target = $region29
    $region28: #{tpu_custom_call.1} parent=1 // pred_region
      %s70 = ssub.s32 2048, 2048
      %71 = vsyncadd [#allocation9], %s70
      %s72 = sshll.u32 [#allocation10], 4
      %s73 = int_to_ptr.vmem [resolvable:$true] %s72
      %78 = dma.hbm_to_vmem [thread:$0]  %s6, 2048, %s73, [#allocation9], 128, 128, 8
    $region29: #{tpu_custom_call.1} parent=1 // pred_fallthru
      _
    // Predicated region
    $region30: #{tpu_custom_call.1} parent=1 // pred_check
      _
    $region31: #{tpu_custom_call.1} parent=1 // pred_check_branch
      %80 = sbr.rel (0) target = $region33
    $region32: #{tpu_custom_call.1} parent=1 // pred_region
      _
    $region33: #{tpu_custom_call.1} parent=1 // pred_fallthru
      _
    // Predicated region
    $region34: #{tpu_custom_call.1} parent=1 // pred_check
      _
    $region35: #{tpu_custom_call.1} parent=1 // pred_check_branch
      %82 = sbr.rel (0) target = $region37
    $region36: #{tpu_custom_call.1} parent=1 // pred_region
      %83 = dma.done [#allocation3], 128
    $region37: #{tpu_custom_call.1} parent=1 // pred_fallthru
      _
    // Predicated region
    $region38: #{tpu_custom_call.1} parent=1 // pred_check
      _
    $region39: #{tpu_custom_call.1} parent=1 // pred_check_branch
      %85 = sbr.rel (0) target = $region41
    $region40: #{tpu_custom_call.1} parent=1 // pred_region
      %86 = dma.done [#allocation6], 2048
    $region41: #{tpu_custom_call.1} parent=1 // pred_fallthru
      _
    // Predicated region
    $region42: #{tpu_custom_call.1} parent=1 // pred_check
      _
    $region43: #{tpu_custom_call.1} parent=1 // pred_check_branch
      %88 = sbr.rel (0) target = $region45
    $region44: #{tpu_custom_call.1} parent=1 // pred_region
      %89 = dma.done [#allocation6], 2048
    $region45: #{tpu_custom_call.1} parent=1 // pred_fallthru
      _
    // Predicated region
    $region46: #{tpu_custom_call.1} parent=1 // pred_check
      _
    $region47: #{tpu_custom_call.1} parent=1 // pred_check_branch
      %91 = sbr.rel (0) target = $region49
    $region48: #{tpu_custom_call.1} parent=1 // pred_region
      %92 = dma.done [#allocation9], 2048
    $region49: #{tpu_custom_call.1} parent=1 // pred_fallthru
      _
    // Predicated region
    $region50: #{tpu_custom_call.1} parent=1 // pred_check
      _
    $region51: #{tpu_custom_call.1} parent=1 // pred_check_branch
      %94 = sbr.rel (0) target = $region53
    $region52: #{tpu_custom_call.1} parent=1 // pred_region
      %95 = dma.done [#allocation9], 2048
    $region53: #{tpu_custom_call.1} parent=1 // pred_fallthru
      _
    %v96 = vld [vmem:[#allocation2] sm:$0xff]
    %v97 = vld [vmem:[#allocation5] sm:$0xff]
    %v98 = vld [vmem:[#allocation5 + $0x8] sm:$0xff]
    %v99 = vld [vmem:[#allocation5 + $0x10] sm:$0xff]
    %v100 = vld [vmem:[#allocation5 + $0x18] sm:$0xff]
    %v101 = vld [vmem:[#allocation5 + $0x20] sm:$0xff]
    %v102 = vld [vmem:[#allocation5 + $0x28] sm:$0xff]
    %v103 = vld [vmem:[#allocation5 + $0x30] sm:$0xff]
    %v104 = vld [vmem:[#allocation5 + $0x38] sm:$0xff]
    %v105 = vld [vmem:[#allocation5 + $0x40] sm:$0xff]
    %v106 = vld [vmem:[#allocation5 + $0x48] sm:$0xff]
    %v107 = vld [vmem:[#allocation5 + $0x50] sm:$0xff]
    %v108 = vld [vmem:[#allocation5 + $0x58] sm:$0xff]
    %v109 = vld [vmem:[#allocation5 + $0x60] sm:$0xff]
    %v110 = vld [vmem:[#allocation5 + $0x68] sm:$0xff]
    %v111 = vld [vmem:[#allocation5 + $0x70] sm:$0xff]
    %v112 = vld [vmem:[#allocation5 + $0x78] sm:$0xff]
    %v113 = vld [vmem:[%s2] sm:$0x1]
    %v115 = vlaneseq
    %v116 = vshrl.u32 %v115, 7
    %v117 = vsub.s32 0, %v116
    %v118 = vrot.slane %v113, %v117
    %120 = vmatprep.subr.mxu0 0.0
    %121 = vmatpush1.msra.mxu0 %v112
    %122 = vmatprep.subr.mxu0 0.0
    %123 = vmatpush1.msra.mxu0 %v111
    %124 = vmatprep.subr.mxu0 0.0
    %125 = vmatpush1.msra.mxu0 %v110
    %126 = vmatprep.subr.mxu0 0.0
    %127 = vmatpush1.msra.mxu0 %v109
    %128 = vmatprep.subr.mxu0 0.0
    %129 = vmatpush1.msra.mxu0 %v108
    %130 = vmatprep.subr.mxu0 0.0
    %131 = vmatpush1.msra.mxu0 %v107
    %132 = vmatprep.subr.mxu0 0.0
    %133 = vmatpush1.msra.mxu0 %v106
    %134 = vmatprep.subr.mxu0 0.0
    %135 = vmatpush1.msra.mxu0 %v105
    %136 = vmatprep.subr.mxu0 0.0
    %137 = vmatpush1.msra.mxu0 %v104
    %138 = vmatprep.subr.mxu0 0.0
    %139 = vmatpush1.msra.mxu0 %v103
    %140 = vmatprep.subr.mxu0 0.0
    %141 = vmatpush1.msra.mxu0 %v102
    %142 = vmatprep.subr.mxu0 0.0
    %143 = vmatpush1.msra.mxu0 %v101
    %144 = vmatprep.subr.mxu0 0.0
    %145 = vmatpush1.msra.mxu0 %v100
    %146 = vmatprep.subr.mxu0 0.0
    %147 = vmatpush1.msra.mxu0 %v99
    %148 = vmatprep.subr.mxu0 0.0
    %149 = vmatpush1.msra.mxu0 %v98
    %150 = vmatprep.subr.mxu0 0.0
    %151 = vmatpush1.msra.mxu0 %v97
    %152 = vmatprep.subr.mxu0 0.0
    %153 = vmatpush2.msra.mxu0 0.0
    %154 = vmatprep.subr.mxu0 0.0
    %155 = vmatpush2.msra.mxu0 0.0
    %156 = vmatprep.subr.mxu0 0.0
    %157 = vmatpush2.msra.mxu0 0.0
    %158 = vmatprep.subr.mxu0 0.0
    %159 = vmatpush2.msra.mxu0 0.0
    %160 = vmatprep.subr.mxu0 0.0
    %161 = vmatpush2.msra.mxu0 0.0
    %162 = vmatprep.subr.mxu0 0.0
    %163 = vmatpush2.msra.mxu0 0.0
    %164 = vmatprep.subr.mxu0 0.0
    %165 = vmatpush2.msra.mxu0 0.0
    %166 = vmatprep.subr.mxu0 0.0
    %167 = vmatpush2.msra.mxu0 0.0
    %168 = vmatprep.subr.mxu0 0.0
    %169 = vmatpush2.msra.mxu0 0.0
    %170 = vmatprep.subr.mxu0 0.0
    %171 = vmatpush2.msra.mxu0 0.0
    %172 = vmatprep.subr.mxu0 0.0
    %173 = vmatpush2.msra.mxu0 0.0
    %174 = vmatprep.subr.mxu0 0.0
    %175 = vmatpush2.msra.mxu0 0.0
    %176 = vmatprep.subr.mxu0 0.0
    %177 = vmatpush2.msra.mxu0 0.0
    %178 = vmatprep.subr.mxu0 0.0
    %179 = vmatpush2.msra.mxu0 0.0
    %180 = vmatprep.subr.mxu0 0.0
    %181 = vmatpush2.msra.mxu0 0.0
    %182 = vmatprep.subr.mxu0 0.0
    %183 = vmatpush2.msra.mxu0 0.0
    %184 = vmatprep.mubr.f32.mxu0 0.0
    %185 = vmatmul.mubr.f32.gmra.mxu0 %v96
    %v186 = vpop.f32.mrf.mxu0
    %v187 = vadd.f32 %v118, %v186
    %v188 = vpop.f32.mrf.mxu0
    %189 = vdwg.mxu0
    %v190 = vmax.f32 %v187, 0.0
    %v191 = vld [vmem:[#allocation7] sm:$0xff]
    %v192 = vld [vmem:[#allocation7 + $0x8] sm:$0xff]
    %v193 = vld [vmem:[#allocation7 + $0x10] sm:$0xff]
    %v194 = vld [vmem:[#allocation7 + $0x18] sm:$0xff]
    %v195 = vld [vmem:[#allocation7 + $0x20] sm:$0xff]
    %v196 = vld [vmem:[#allocation7 + $0x28] sm:$0xff]
    %v197 = vld [vmem:[#allocation7 + $0x30] sm:$0xff]
    %v198 = vld [vmem:[#allocation7 + $0x38] sm:$0xff]
    %v199 = vld [vmem:[#allocation7 + $0x40] sm:$0xff]
    %v200 = vld [vmem:[#allocation7 + $0x48] sm:$0xff]
    %v201 = vld [vmem:[#allocation7 + $0x50] sm:$0xff]
    %v202 = vld [vmem:[#allocation7 + $0x58] sm:$0xff]
    %v203 = vld [vmem:[#allocation7 + $0x60] sm:$0xff]
    %v204 = vld [vmem:[#allocation7 + $0x68] sm:$0xff]
    %v205 = vld [vmem:[#allocation7 + $0x70] sm:$0xff]
    %v206 = vld [vmem:[#allocation7 + $0x78] sm:$0xff]
    %v207 = vld [vmem:[%s4] sm:$0x1]
    %v209 = vlaneseq
    %v210 = vshrl.u32 %v209, 7
    %v211 = vsub.s32 0, %v210
    %v212 = vrot.slane %v207, %v211
    %214 = vmatprep.subr.mxu0 0.0
    %215 = vmatpush1.msra.mxu0 %v206
    %216 = vmatprep.subr.mxu0 0.0
    %217 = vmatpush1.msra.mxu0 %v205
    %218 = vmatprep.subr.mxu0 0.0
    %219 = vmatpush1.msra.mxu0 %v204
    %220 = vmatprep.subr.mxu0 0.0
    %221 = vmatpush1.msra.mxu0 %v203
    %222 = vmatprep.subr.mxu0 0.0
    %223 = vmatpush1.msra.mxu0 %v202
    %224 = vmatprep.subr.mxu0 0.0
    %225 = vmatpush1.msra.mxu0 %v201
    %226 = vmatprep.subr.mxu0 0.0
    %227 = vmatpush1.msra.mxu0 %v200
    %228 = vmatprep.subr.mxu0 0.0
    %229 = vmatpush1.msra.mxu0 %v199
    %230 = vmatprep.subr.mxu0 0.0
    %231 = vmatpush1.msra.mxu0 %v198
    %232 = vmatprep.subr.mxu0 0.0
    %233 = vmatpush1.msra.mxu0 %v197
    %234 = vmatprep.subr.mxu0 0.0
    %235 = vmatpush1.msra.mxu0 %v196
    %236 = vmatprep.subr.mxu0 0.0
    %237 = vmatpush1.msra.mxu0 %v195
    %238 = vmatprep.subr.mxu0 0.0
    %239 = vmatpush1.msra.mxu0 %v194
    %240 = vmatprep.subr.mxu0 0.0
    %241 = vmatpush1.msra.mxu0 %v193
    %242 = vmatprep.subr.mxu0 0.0
    %243 = vmatpush1.msra.mxu0 %v192
    %244 = vmatprep.subr.mxu0 0.0
    %245 = vmatpush1.msra.mxu0 %v191
    %246 = vmatprep.subr.mxu0 0.0
    %247 = vmatpush2.msra.mxu0 0.0
    %248 = vmatprep.subr.mxu0 0.0
    %249 = vmatpush2.msra.mxu0 0.0
    %250 = vmatprep.subr.mxu0 0.0
    %251 = vmatpush2.msra.mxu0 0.0
    %252 = vmatprep.subr.mxu0 0.0
    %253 = vmatpush2.msra.mxu0 0.0
    %254 = vmatprep.subr.mxu0 0.0
    %255 = vmatpush2.msra.mxu0 0.0
    %256 = vmatprep.subr.mxu0 0.0
    %257 = vmatpush2.msra.mxu0 0.0
    %258 = vmatprep.subr.mxu0 0.0
    %259 = vmatpush2.msra.mxu0 0.0
    %260 = vmatprep.subr.mxu0 0.0
    %261 = vmatpush2.msra.mxu0 0.0
    %262 = vmatprep.subr.mxu0 0.0
    %263 = vmatpush2.msra.mxu0 0.0
    %264 = vmatprep.subr.mxu0 0.0
    %265 = vmatpush2.msra.mxu0 0.0
    %266 = vmatprep.subr.mxu0 0.0
    %267 = vmatpush2.msra.mxu0 0.0
    %268 = vmatprep.subr.mxu0 0.0
    %269 = vmatpush2.msra.mxu0 0.0
    %270 = vmatprep.subr.mxu0 0.0
    %271 = vmatpush2.msra.mxu0 0.0
    %272 = vmatprep.subr.mxu0 0.0
    %273 = vmatpush2.msra.mxu0 0.0
    %274 = vmatprep.subr.mxu0 0.0
    %275 = vmatpush2.msra.mxu0 0.0
    %276 = vmatprep.subr.mxu0 0.0
    %277 = vmatpush2.msra.mxu0 0.0
    %278 = vmatprep.mubr.f32.mxu0 0.0
    %279 = vmatmul.mubr.f32.gmra.mxu0 %v190
    %v280 = vpop.f32.mrf.mxu0
    %v281 = vadd.f32 %v212, %v280
    %v282 = vpop.f32.mrf.mxu0
    %283 = vdwg.mxu0
    %v284 = vmax.f32 %v281, 0.0
    %v285 = vld [vmem:[#allocation8] sm:$0xff]
    %v286 = vld [vmem:[#allocation8 + $0x8] sm:$0xff]
    %v287 = vld [vmem:[#allocation8 + $0x10] sm:$0xff]
    %v288 = vld [vmem:[#allocation8 + $0x18] sm:$0xff]
    %v289 = vld [vmem:[#allocation8 + $0x20] sm:$0xff]
    %v290 = vld [vmem:[#allocation8 + $0x28] sm:$0xff]
    %v291 = vld [vmem:[#allocation8 + $0x30] sm:$0xff]
    %v292 = vld [vmem:[#allocation8 + $0x38] sm:$0xff]
    %v293 = vld [vmem:[#allocation8 + $0x40] sm:$0xff]
    %v294 = vld [vmem:[#allocation8 + $0x48] sm:$0xff]
    %v295 = vld [vmem:[#allocation8 + $0x50] sm:$0xff]
    %v296 = vld [vmem:[#allocation8 + $0x58] sm:$0xff]
    %v297 = vld [vmem:[#allocation8 + $0x60] sm:$0xff]
    %v298 = vld [vmem:[#allocation8 + $0x68] sm:$0xff]
    %v299 = vld [vmem:[#allocation8 + $0x70] sm:$0xff]
    %v300 = vld [vmem:[#allocation8 + $0x78] sm:$0xff]
    %v301 = vld [vmem:[#allocation10] sm:$0xff]
    %v302 = vld [vmem:[#allocation10 + $0x8] sm:$0xff]
    %v303 = vld [vmem:[#allocation10 + $0x10] sm:$0xff]
    %v304 = vld [vmem:[#allocation10 + $0x18] sm:$0xff]
    %v305 = vld [vmem:[#allocation10 + $0x20] sm:$0xff]
    %v306 = vld [vmem:[#allocation10 + $0x28] sm:$0xff]
    %v307 = vld [vmem:[#allocation10 + $0x30] sm:$0xff]
    %v308 = vld [vmem:[#allocation10 + $0x38] sm:$0xff]
    %v309 = vld [vmem:[#allocation10 + $0x40] sm:$0xff]
    %v310 = vld [vmem:[#allocation10 + $0x48] sm:$0xff]
    %v311 = vld [vmem:[#allocation10 + $0x50] sm:$0xff]
    %v312 = vld [vmem:[#allocation10 + $0x58] sm:$0xff]
    %v313 = vld [vmem:[#allocation10 + $0x60] sm:$0xff]
    %v314 = vld [vmem:[#allocation10 + $0x68] sm:$0xff]
    %v315 = vld [vmem:[#allocation10 + $0x70] sm:$0xff]
    %v316 = vld [vmem:[#allocation10 + $0x78] sm:$0xff]
    %317 = vmatprep.subr.mxu0 0.0
    %318 = vmatpush1.msra.mxu0 %v316
    %319 = vmatprep.subr.mxu0 0.0
    %320 = vmatpush1.msra.mxu0 %v315
    %321 = vmatprep.subr.mxu0 0.0
    %322 = vmatpush1.msra.mxu0 %v314
    %323 = vmatprep.subr.mxu0 0.0
    %324 = vmatpush1.msra.mxu0 %v313
    %325 = vmatprep.subr.mxu0 0.0
    %326 = vmatpush1.msra.mxu0 %v312
    %327 = vmatprep.subr.mxu0 0.0
    %328 = vmatpush1.msra.mxu0 %v311
    %329 = vmatprep.subr.mxu0 0.0
    %330 = vmatpush1.msra.mxu0 %v310
    %331 = vmatprep.subr.mxu0 0.0
    %332 = vmatpush1.msra.mxu0 %v309
    %333 = vmatprep.subr.mxu0 0.0
    %334 = vmatpush1.msra.mxu0 %v308
    %335 = vmatprep.subr.mxu0 0.0
    %336 = vmatpush1.msra.mxu0 %v307
    %337 = vmatprep.subr.mxu0 0.0
    %338 = vmatpush1.msra.mxu0 %v306
    %339 = vmatprep.subr.mxu0 0.0
    %340 = vmatpush1.msra.mxu0 %v305
    %341 = vmatprep.subr.mxu0 0.0
    %342 = vmatpush1.msra.mxu0 %v304
    %343 = vmatprep.subr.mxu0 0.0
    %344 = vmatpush1.msra.mxu0 %v303
    %345 = vmatprep.subr.mxu0 0.0
    %346 = vmatpush1.msra.mxu0 %v302
    %347 = vmatprep.subr.mxu0 0.0
    %348 = vmatpush1.msra.mxu0 %v301
    %349 = vmatprep.subr.mxu0 0.0
    %350 = vmatpush2.msra.mxu0 0.0
    %351 = vmatprep.subr.mxu0 0.0
    %352 = vmatpush2.msra.mxu0 0.0
    %353 = vmatprep.subr.mxu0 0.0
    %354 = vmatpush2.msra.mxu0 0.0
    %355 = vmatprep.subr.mxu0 0.0
    %356 = vmatpush2.msra.mxu0 0.0
    %357 = vmatprep.subr.mxu0 0.0
    %358 = vmatpush2.msra.mxu0 0.0
    %359 = vmatprep.subr.mxu0 0.0
    %360 = vmatpush2.msra.mxu0 0.0
    %361 = vmatprep.subr.mxu0 0.0
    %362 = vmatpush2.msra.mxu0 0.0
    %363 = vmatprep.subr.mxu0 0.0
    %364 = vmatpush2.msra.mxu0 0.0
    %365 = vmatprep.subr.mxu0 0.0
    %366 = vmatpush2.msra.mxu0 0.0
    %367 = vmatprep.subr.mxu0 0.0
    %368 = vmatpush2.msra.mxu0 0.0
    %369 = vmatprep.subr.mxu0 0.0
    %370 = vmatpush2.msra.mxu0 0.0
    %371 = vmatprep.subr.mxu0 0.0
    %372 = vmatpush2.msra.mxu0 0.0
    %373 = vmatprep.subr.mxu0 0.0
    %374 = vmatpush2.msra.mxu0 0.0
    %375 = vmatprep.subr.mxu0 0.0
    %376 = vmatpush2.msra.mxu0 0.0
    %377 = vmatprep.subr.mxu0 0.0
    %378 = vmatpush2.msra.mxu0 0.0
    %379 = vmatprep.subr.mxu0 0.0
    %380 = vmatpush2.msra.mxu0 0.0
    %381 = vmatprep.mubr.f32.mxu0 0.0
    %382 = vmatmul.mubr.f32.gmra.mxu0 %v96
    %v383 = vpop.f32.mrf.mxu0
    %v384 = vadd.f32 0.0, %v383
    %v385 = vpop.f32.mrf.mxu0
    %386 = vdwg.mxu0
    %387 = vmatprep.subr.mxu0 0.0
    %388 = vmatpush1.msra.mxu0 %v300
    %389 = vmatprep.subr.mxu0 0.0
    %390 = vmatpush1.msra.mxu0 %v299
    %391 = vmatprep.subr.mxu0 0.0
    %392 = vmatpush1.msra.mxu0 %v298
    %393 = vmatprep.subr.mxu0 0.0
    %394 = vmatpush1.msra.mxu0 %v297
    %395 = vmatprep.subr.mxu0 0.0
    %396 = vmatpush1.msra.mxu0 %v296
    %397 = vmatprep.subr.mxu0 0.0
    %398 = vmatpush1.msra.mxu0 %v295
    %399 = vmatprep.subr.mxu0 0.0
    %400 = vmatpush1.msra.mxu0 %v294
    %401 = vmatprep.subr.mxu0 0.0
    %402 = vmatpush1.msra.mxu0 %v293
    %403 = vmatprep.subr.mxu0 0.0
    %404 = vmatpush1.msra.mxu0 %v292
    %405 = vmatprep.subr.mxu0 0.0
    %406 = vmatpush1.msra.mxu0 %v291
    %407 = vmatprep.subr.mxu0 0.0
    %408 = vmatpush1.msra.mxu0 %v290
    %409 = vmatprep.subr.mxu0 0.0
    %410 = vmatpush1.msra.mxu0 %v289
    %411 = vmatprep.subr.mxu0 0.0
    %412 = vmatpush1.msra.mxu0 %v288
    %413 = vmatprep.subr.mxu0 0.0
    %414 = vmatpush1.msra.mxu0 %v287
    %415 = vmatprep.subr.mxu0 0.0
    %416 = vmatpush1.msra.mxu0 %v286
    %417 = vmatprep.subr.mxu0 0.0
    %418 = vmatpush1.msra.mxu0 %v285
    %419 = vmatprep.subr.mxu0 0.0
    %420 = vmatpush2.msra.mxu0 0.0
    %421 = vmatprep.subr.mxu0 0.0
    %422 = vmatpush2.msra.mxu0 0.0
    %423 = vmatprep.subr.mxu0 0.0
    %424 = vmatpush2.msra.mxu0 0.0
    %425 = vmatprep.subr.mxu0 0.0
    %426 = vmatpush2.msra.mxu0 0.0
    %427 = vmatprep.subr.mxu0 0.0
    %428 = vmatpush2.msra.mxu0 0.0
    %429 = vmatprep.subr.mxu0 0.0
    %430 = vmatpush2.msra.mxu0 0.0
    %431 = vmatprep.subr.mxu0 0.0
    %432 = vmatpush2.msra.mxu0 0.0
    %433 = vmatprep.subr.mxu0 0.0
    %434 = vmatpush2.msra.mxu0 0.0
    %435 = vmatprep.subr.mxu0 0.0
    %436 = vmatpush2.msra.mxu0 0.0
    %437 = vmatprep.subr.mxu0 0.0
    %438 = vmatpush2.msra.mxu0 0.0
    %439 = vmatprep.subr.mxu0 0.0
    %440 = vmatpush2.msra.mxu0 0.0
    %441 = vmatprep.subr.mxu0 0.0
    %442 = vmatpush2.msra.mxu0 0.0
    %443 = vmatprep.subr.mxu0 0.0
    %444 = vmatpush2.msra.mxu0 0.0
    %445 = vmatprep.subr.mxu0 0.0
    %446 = vmatpush2.msra.mxu0 0.0
    %447 = vmatprep.subr.mxu0 0.0
    %448 = vmatpush2.msra.mxu0 0.0
    %449 = vmatprep.subr.mxu0 0.0
    %450 = vmatpush2.msra.mxu0 0.0
    %451 = vmatprep.mubr.f32.mxu0 0.0
    %452 = vmatmul.mubr.f32.gmra.mxu0 %v284
    %v453 = vpop.f32.mrf.mxu0
    %v454 = vadd.f32 %v384, %v453
    %v455 = vpop.f32.mrf.mxu0
    %456 = vdwg.mxu0
    %v457 = vld [vmem:[%s7] sm:$0x1]
    %v459 = vlaneseq
    %v460 = vshrl.u32 %v459, 7
    %v461 = vsub.s32 0, %v460
    %v462 = vrot.slane %v457, %v461
    %v464 = vadd.f32 %v454, %v462
    %v465 = vmax.f32 %v464, 0.0
    %466 = vst [vmem:[#allocation11] sm:$0xff] %v465
    // Predicated region
    $region54: #{tpu_custom_call.1} parent=1 // pred_check
      _
    $region55: #{tpu_custom_call.1} parent=1 // pred_check_branch
      %468 = sbr.rel (0) target = $region57
    $region56: #{tpu_custom_call.1} parent=1 // pred_region
      %s470 = ssub.s32 128, 128
      %471 = vsyncadd [#allocation4], %s470
      %s473 = sshll.u32 [#allocation11], 4
      %s474 = int_to_ptr.vmem [resolvable:$true] %s473
      %476 = dma.vmem_to_hbm [thread:$0]  %s474, 128, %s8, [#allocation4]
    $region57: #{tpu_custom_call.1} parent=1 // pred_fallthru
      _
    // Predicated region
    $region58: #{tpu_custom_call.1} parent=1 // pred_check
      _
    $region59: #{tpu_custom_call.1} parent=1 // pred_check_branch
      %478 = sbr.rel (0) target = $region61
    $region60: #{tpu_custom_call.1} parent=1 // pred_region
      %479 = dma.done [#allocation4], 128
    $region61: #{tpu_custom_call.1} parent=1 // pred_fallthru
      _
    %480 = vsyncpa [#allocation3], 1
    %481 = vsyncpa [#allocation6], 1
    %482 = vsyncpa [#allocation9], 1
    %483 = vsyncpa [#allocation4], 1

</llo_original>
